<compile_context>
chip_gen: v7x
topology: tpu7x:2x2x1
jax: 0.10.0
libtpu: 0.0.40
codegen_flags: <defaults>
</compile_context>

<pallas_src>
import jax
import jax.numpy as jnp
from jax.experimental import pallas as pl
from jax.experimental.pallas import tpu as pltpu

_LANE = 128  # TPU lane width; output last dim is padded to a multiple of this.


def _mlp_kernel(x_ref, w1_ref, b1_ref, w2_ref, b2_ref, o_ref):
    # Layer 1: MXU matmul with f32 accumulate; bias + tanh stay in f32
    # (older VPU/EUP generations have no bf16 elementwise).
    h = jnp.tanh(
        jnp.dot(x_ref[...], w1_ref[...], preferred_element_type=jnp.float32)
        + b1_ref[...]
    )
    # Layer 2: K=H fits a single MXU pass; output is lane-dense (C padded to 128).
    y = (
        jnp.dot(h.astype(w2_ref.dtype), w2_ref[...],
                preferred_element_type=jnp.float32)
        + b2_ref[...]
    )
    o_ref[...] = y.astype(o_ref.dtype)


def _mxu_operand_dtype():
    """bf16 MXU operands on v5e/v5p/v6e/v7x; f32 only on v2-v4.

    NOTE: queries jax.devices() at Python time; under multi-host / AOT
    compilation pass mxu_dtype explicitly instead.
    """
    try:
        kind = jax.devices()[0].device_kind.lower()
    except Exception:
        return jnp.float32
    for old in ("v2", "v3", "v4"):
        if old in kind:
            return jnp.float32
    return jnp.bfloat16


def prepare_params(w1, b1, w2, b2, mxu_dtype=None):
    """One-time param prep: cast to MXU operand dtype, pad output lanes to 128.

    Do this at model-load time, NOT per forward call (the casts/pads are
    separate XLA ops that are not hidden by the kernel pipeline).
    """
    if mxu_dtype is None:
        mxu_dtype = _mxu_operand_dtype()
    S, H = w1.shape
    C = w2.shape[1]
    c_pad = pl.cdiv(C, _LANE) * _LANE

    w1_p = w1.astype(mxu_dtype)
    b1_p = b1.reshape(1, H).astype(jnp.float32)
    w2_p = jnp.zeros((H, c_pad), mxu_dtype).at[:, :C].set(w2.astype(mxu_dtype))
    b2_p = jnp.zeros((1, c_pad), jnp.float32).at[:, :C].set(
        b2.reshape(1, C).astype(jnp.float32))
    return (w1_p, b1_p, w2_p, b2_p), C


def base_ai_ctrl_forward(x, params, ctrl_dim, *, tile_b=512):
    """Fused 2-layer MLP forward pass: [B, state_dim] -> [B, ctrl_dim].

    `params` must come from prepare_params() (cast + lane-padded once).
    """
    w1, b1, w2, b2 = params
    B, S = x.shape
    H = w1.shape[1]
    c_pad = w2.shape[1]
    mxu_dtype = w1.dtype
    out_dtype = x.dtype

    x_in = x.astype(mxu_dtype)

    # Batch tiling: prefer a single full-batch block (no pad, no per-step
    # overhead) or an exact tiling; pad only as a ragged-B fallback.
    if B <= tile_b:
        tb, nb = B, 1
    elif B % tile_b == 0:
        tb, nb = tile_b, B // tile_b
    else:
        # TODO(synk): handle the ragged tail in-kernel with a row mask instead
        #             of materializing a padded copy of x in HBM.
        tb = tile_b
        nb = pl.cdiv(B, tile_b)
        x_in = jnp.pad(x_in, ((0, nb * tb - B), (0, 0)))
    B_pad = nb * tb

    mxu_bytes = jnp.dtype(mxu_dtype).itemsize
    cost = pl.CostEstimate(
        flops=2 * B_pad * (S * H + H * c_pad),
        transcendentals=B_pad * H,
        bytes_accessed=(B_pad * S + S * H + H * c_pad) * mxu_bytes
        + (H + c_pad) * 4
        + B_pad * c_pad * jnp.dtype(out_dtype).itemsize,
    )

    out = pl.pallas_call(
        _mlp_kernel,
        out_shape=jax.ShapeDtypeStruct((B_pad, c_pad), out_dtype),
        grid_spec=pltpu.PrefetchScalarGridSpec(
            num_scalar_prefetch=0,
            grid=(nb,),  # batch row-blocks; software-pipelined x / out DMAs
            in_specs=[
                pl.BlockSpec((tb, S), lambda i: (i, 0)),       # x: tiled over B
                pl.BlockSpec((S, H), lambda i: (0, 0)),        # W1: VMEM-resident
                pl.BlockSpec((1, H), lambda i: (0, 0)),        # b1: VMEM-resident
                pl.BlockSpec((H, c_pad), lambda i: (0, 0)),    # W2: VMEM-resident
                pl.BlockSpec((1, c_pad), lambda i: (0, 0)),    # b2: VMEM-resident
            ],
            out_specs=pl.BlockSpec((tb, c_pad), lambda i: (i, 0)),  # lane-dense
        ),
        compiler_params=pltpu.CompilerParams(
            # Only worth sharding across TensorCores when there are real
            # independent grid steps; a single-step grid stays on one core.
            dimension_semantics=("parallel",) if nb >= 2 else ("arbitrary",),
        ),
        cost_estimate=cost,
    )(x_in, w1, b1, w2, b2)

    # Slice off batch pad (rare) and the lane-padding of the control dim.
    return out[:B, :ctrl_dim]


def reference_forward(x, w1, b1, w2, b2, mxu_dtype=jnp.float32):
    """Pure-JAX reference, matching the kernel's operand-precision path."""
    f32 = jnp.float32
    xc = x.astype(mxu_dtype).astype(f32)
    w1c = w1.astype(mxu_dtype).astype(f32)
    w2c = w2.astype(mxu_dtype).astype(f32)
    h = jnp.tanh(xc @ w1c + b1.reshape(1, -1).astype(f32))
    hc = h.astype(mxu_dtype).astype(f32)
    return hc @ w2c + b2.reshape(1, -1).astype(f32)


if __name__ == "__main__":
    key = jax.random.PRNGKey(0)
    kx, k1, k2, k3, k4 = jax.random.split(key, 5)

    # states -> ctrls regression shapes.
    B, STATE_DIM, HIDDEN, CTRL_DIM = 512, 32, 64, 4
    TILE_B = 512  # full batch in one block: zero pipeline overhead, no padding

    x = jax.random.normal(kx, (B, STATE_DIM), dtype=jnp.float32)
    w1 = jax.random.normal(k1, (STATE_DIM, HIDDEN), dtype=jnp.float32) * 0.1
    b1 = jax.random.normal(k2, (1, HIDDEN), dtype=jnp.float32) * 0.01
    w2 = jax.random.normal(k3, (HIDDEN, CTRL_DIM), dtype=jnp.float32) * 0.1
    b2 = jax.random.normal(k4, (1, CTRL_DIM), dtype=jnp.float32) * 0.01

    mxu_dtype = _mxu_operand_dtype()
    # One-time param prep (cast + lane-pad), hoisted out of the forward path.
    params, ctrl_dim = prepare_params(w1, b1, w2, b2, mxu_dtype=mxu_dtype)

    out = base_ai_ctrl_forward(x, params, ctrl_dim, tile_b=TILE_B)
    out = jax.block_until_ready(out)

    ref = reference_forward(x, w1, b1, w2, b2, mxu_dtype=mxu_dtype)

    assert out.shape == (B, CTRL_DIM)
    # bf16 MXU operands on v5e+/v6e/v7x -> looser tolerance than pure f32.
    assert jnp.allclose(out, ref, atol=2e-2, rtol=2e-2), "mismatch vs reference"

    print("KERNEL_OK")
</pallas_src>

<mosaic_0001>
module attributes {stable_mosaic.version = 11 : i64} {
  func.func @_mlp_kernel(%arg0: i32, %arg1: memref<512x32xbf16, #tpu.memory_space<vmem>>, %arg2: memref<32x64xbf16, #tpu.memory_space<vmem>>, %arg3: memref<1x64xf32, #tpu.memory_space<vmem>>, %arg4: memref<64x128xbf16, #tpu.memory_space<vmem>>, %arg5: memref<1x128xf32, #tpu.memory_space<vmem>>, %arg6: memref<512x128xf32, #tpu.memory_space<vmem>>) attributes {dimension_semantics = [#tpu.dimension_semantics<arbitrary>], iteration_bounds = array<i64: 1>, scalar_prefetch = 0 : i64, scratch_operands = 0 : i64, tpu.core_type = #tpu.core_type<tc>, window_params = [{transform_indices = @transform_0, window_bounds = array<i64: 512, 32>}, {pipeline_mode = #tpu.pipeline_mode<synchronous>, transform_indices = @transform_1, window_bounds = array<i64: 32, 64>}, {pipeline_mode = #tpu.pipeline_mode<synchronous>, transform_indices = @transform_2, window_bounds = array<i64: 1, 64>}, {pipeline_mode = #tpu.pipeline_mode<synchronous>, transform_indices = @transform_3, window_bounds = array<i64: 64, 128>}, {pipeline_mode = #tpu.pipeline_mode<synchronous>, transform_indices = @transform_4, window_bounds = array<i64: 1, 128>}, {transform_indices = @transform_5, window_bounds = array<i64: 512, 128>}]} {
    %c0 = arith.constant 0 : index
    %c0_0 = arith.constant 0 : index
    %0 = vector.load %arg1[%c0, %c0_0] : memref<512x32xbf16, #tpu.memory_space<vmem>>, vector<512x32xbf16>
    %c0_1 = arith.constant 0 : index
    %c0_2 = arith.constant 0 : index
    %1 = vector.load %arg2[%c0_1, %c0_2] : memref<32x64xbf16, #tpu.memory_space<vmem>>, vector<32x64xbf16>
    %cst = arith.constant dense<0.000000e+00> : vector<512x64xf32>
    %2 = tpu.matmul %0, %1, %cst {dimension_numbers = #tpu.dot_dimension_numbers<[1], [0], [0], [1], [0, 0, 1, 1], [], []>} : vector<512x32xbf16>, vector<32x64xbf16>, vector<512x64xf32> -> vector<512x64xf32>
    %c0_3 = arith.constant 0 : index
    %c0_4 = arith.constant 0 : index
    %3 = vector.load %arg3[%c0_3, %c0_4] : memref<1x64xf32, #tpu.memory_space<vmem>>, vector<1x64xf32>
    %4 = vector.broadcast %3 : vector<1x64xf32> to vector<512x64xf32>
    %5 = arith.addf %2, %4 : vector<512x64xf32>
    %6 = math.tanh %5 : vector<512x64xf32>
    %7 = arith.truncf %6 : vector<512x64xf32> to vector<512x64xbf16>
    %c0_5 = arith.constant 0 : index
    %c0_6 = arith.constant 0 : index
    %8 = vector.load %arg4[%c0_5, %c0_6] : memref<64x128xbf16, #tpu.memory_space<vmem>>, vector<64x128xbf16>
    %cst_7 = arith.constant dense<0.000000e+00> : vector<512x128xf32>
    %9 = tpu.matmul %7, %8, %cst_7 {dimension_numbers = #tpu.dot_dimension_numbers<[1], [0], [0], [1], [0, 0, 1, 1], [], []>} : vector<512x64xbf16>, vector<64x128xbf16>, vector<512x128xf32> -> vector<512x128xf32>
    %c0_8 = arith.constant 0 : index
    %c0_9 = arith.constant 0 : index
    %10 = vector.load %arg5[%c0_8, %c0_9] : memref<1x128xf32, #tpu.memory_space<vmem>>, vector<1x128xf32>
    %11 = vector.broadcast %10 : vector<1x128xf32> to vector<512x128xf32>
    %12 = arith.addf %9, %11 : vector<512x128xf32>
    %c0_10 = arith.constant 0 : index
    %c0_11 = arith.constant 0 : index
    %13 = vector.load %arg6[%c0_10, %c0_11] : memref<512x128xf32, #tpu.memory_space<vmem>>, vector<512x128xf32>
    tpu.vector_store %arg6[%c0_10, %c0_11], %12 {strides = array<i32>} : memref<512x128xf32, #tpu.memory_space<vmem>>, vector<512x128xf32>,
    return
  }
  func.func @transform_0(%arg0: i32) -> (i32, i32) {
    %c0_i32 = arith.constant 0 : i32
    %c0_i32_0 = arith.constant 0 : i32
    return %arg0, %c0_i32 : i32, i32
  }
  func.func @transform_1(%arg0: i32) -> (i32, i32) {
    %c0_i32 = arith.constant 0 : i32
    %c0_i32_0 = arith.constant 0 : i32
    %c0_i32_1 = arith.constant 0 : i32
    return %c0_i32, %c0_i32_0 : i32, i32
  }
  func.func @transform_2(%arg0: i32) -> (i32, i32) {
    %c0_i32 = arith.constant 0 : i32
    %c0_i32_0 = arith.constant 0 : i32
    %c0_i32_1 = arith.constant 0 : i32
    return %c0_i32, %c0_i32_0 : i32, i32
  }
  func.func @transform_3(%arg0: i32) -> (i32, i32) {
    %c0_i32 = arith.constant 0 : i32
    %c0_i32_0 = arith.constant 0 : i32
    %c0_i32_1 = arith.constant 0 : i32
    return %c0_i32, %c0_i32_0 : i32, i32
  }
  func.func @transform_4(%arg0: i32) -> (i32, i32) {
    %c0_i32 = arith.constant 0 : i32
    %c0_i32_0 = arith.constant 0 : i32
    %c0_i32_1 = arith.constant 0 : i32
    return %c0_i32, %c0_i32_0 : i32, i32
  }
  func.func @transform_5(%arg0: i32) -> (i32, i32) {
    %c0_i32 = arith.constant 0 : i32
    %c0_i32_0 = arith.constant 0 : i32
    return %arg0, %c0_i32 : i32, i32
  }
}

</mosaic_0001>

<llo_original>
// kernel: tpu_custom_call.1
$region0: #{tpu_custom_call.1}
  #allocation0 [shape = 'u32[]', space=smem, size = 0x4, offset = 0x4, fixed_abs, tag = 'smem constant byte address 0x4 - core index']
  #allocation1 [shape = 'u32[144,128]{1,0:T(1,128)}', space=vmem, size = 0x12000, scoped, tag = 'internal scratch']
  %s0 = inlined_call_operand.vmem [shape: bf16[512,32], index: 0, kind: input, shape index: {}]
  %s1 = inlined_call_operand.vmem [shape: bf16[32,64], index: 1, kind: input, shape index: {}]
  %s2 = inlined_call_operand.vmem [shape: f32[1,64], index: 2, kind: input, shape index: {}]
  %s3 = inlined_call_operand.vmem [shape: bf16[64,128], index: 3, kind: input, shape index: {}]
  %s4 = inlined_call_operand.vmem [shape: f32[1,128], index: 4, kind: input, shape index: {}]
  %s5 = inlined_call_operand.hbm [shape: f32[512,128], index: 5, kind: output, shape index: {}]
  %s6 = sld [smem:[#allocation0]]
  $region30: #{tpu_custom_call.1} parent=0
    _
  %s8 = ssub.s32 1, %s6
  %s9 = scalar_select 0, %s8, %s6
  $region1: #{tpu_custom_call.1} parent=0
    #allocation2 [shape = 'u8[262144]{0}', space=vmem, size = 0x40000, scoped, tag = 'output window, operand 0, single buffered']
    #allocation3 [shape = 's32[1]{0}', space=sflag, size = 0x4, scoped, tag = 'scoped memory for tpu_custom_call.1']
    %10 = vsyncpa [#allocation3], 0
    // Predicated region
    $region2: #{tpu_custom_call.1} parent=1 // pred_check
      _
    $region3: #{tpu_custom_call.1} parent=1 // pred_check_branch
      %12 = sbr.rel (0) target = $region5
    $region4: #{tpu_custom_call.1} parent=1 // pred_region
      _
    $region5: #{tpu_custom_call.1} parent=1 // pred_fallthru
      _
    // Predicated region
    $region6: #{tpu_custom_call.1} parent=1 // pred_check
      _
    $region7: #{tpu_custom_call.1} parent=1 // pred_check_branch
      %14 = sbr.rel (0) target = $region9
    $region8: #{tpu_custom_call.1} parent=1 // pred_region
      _
    $region9: #{tpu_custom_call.1} parent=1 // pred_fallthru
      _
    // Predicated region
    $region10: #{tpu_custom_call.1} parent=1 // pred_check
      _
    $region11: #{tpu_custom_call.1} parent=1 // pred_check_branch
      %16 = sbr.rel (0) target = $region13
    $region12: #{tpu_custom_call.1} parent=1 // pred_region
      _
    $region13: #{tpu_custom_call.1} parent=1 // pred_fallthru
      _
    // Predicated region
    $region14: #{tpu_custom_call.1} parent=1 // pred_check
      _
    $region15: #{tpu_custom_call.1} parent=1 // pred_check_branch
      %18 = sbr.rel (0) target = $region17
    $region16: #{tpu_custom_call.1} parent=1 // pred_region
      _
    $region17: #{tpu_custom_call.1} parent=1 // pred_fallthru
      _
    // Predicated region
    $region18: #{tpu_custom_call.1} parent=1 // pred_check
      _
    $region19: #{tpu_custom_call.1} parent=1 // pred_check_branch
      %20 = sbr.rel (0) target = $region21
    $region20: #{tpu_custom_call.1} parent=1 // pred_region
      _
    $region21: #{tpu_custom_call.1} parent=1 // pred_fallthru
      _
    %v22 = vld [vmem:[%s0] sm:$0xf]
    %v23 = vld [vmem:[%s0 + $0x4] sm:$0xf]
    %v24 = vld [vmem:[%s0 + $0x8] sm:$0xf]
    %v25 = vld [vmem:[%s0 + $0xc] sm:$0xf]
    %v26 = vld [vmem:[%s0 + $0x10] sm:$0xf]
    %v27 = vld [vmem:[%s0 + $0x14] sm:$0xf]
    %v28 = vld [vmem:[%s0 + $0x18] sm:$0xf]
    %v29 = vld [vmem:[%s0 + $0x1c] sm:$0xf]
    %v30 = vld [vmem:[%s0 + $0x20] sm:$0xf]
    %v31 = vld [vmem:[%s0 + $0x24] sm:$0xf]
    %v32 = vld [vmem:[%s0 + $0x28] sm:$0xf]
    %v33 = vld [vmem:[%s0 + $0x2c] sm:$0xf]
    %v34 = vld [vmem:[%s0 + $0x30] sm:$0xf]
    %v35 = vld [vmem:[%s0 + $0x34] sm:$0xf]
    %v36 = vld [vmem:[%s0 + $0x38] sm:$0xf]
    %v37 = vld [vmem:[%s0 + $0x3c] sm:$0xf]
    %v38 = vld [vmem:[%s0 + $0x40] sm:$0xf]
    %v39 = vld [vmem:[%s0 + $0x44] sm:$0xf]
    %v40 = vld [vmem:[%s0 + $0x48] sm:$0xf]
    %v41 = vld [vmem:[%s0 + $0x4c] sm:$0xf]
    %v42 = vld [vmem:[%s0 + $0x50] sm:$0xf]
    %v43 = vld [vmem:[%s0 + $0x54] sm:$0xf]
    %v44 = vld [vmem:[%s0 + $0x58] sm:$0xf]
    %v45 = vld [vmem:[%s0 + $0x5c] sm:$0xf]
    %v46 = vld [vmem:[%s0 + $0x60] sm:$0xf]
    %v47 = vld [vmem:[%s0 + $0x64] sm:$0xf]
    %v48 = vld [vmem:[%s0 + $0x68] sm:$0xf]
    %v49 = vld [vmem:[%s0 + $0x6c] sm:$0xf]
    %v50 = vld [vmem:[%s0 + $0x70] sm:$0xf]
    %v51 = vld [vmem:[%s0 + $0x74] sm:$0xf]
    %v52 = vld [vmem:[%s0 + $0x78] sm:$0xf]
    %v53 = vld [vmem:[%s0 + $0x7c] sm:$0xf]
    %v54 = vld [vmem:[%s0 + $0x80] sm:$0xf]
    %v55 = vld [vmem:[%s0 + $0x84] sm:$0xf]
    %v56 = vld [vmem:[%s0 + $0x88] sm:$0xf]
    %v57 = vld [vmem:[%s0 + $0x8c] sm:$0xf]
    %v58 = vld [vmem:[%s0 + $0x90] sm:$0xf]
    %v59 = vld [vmem:[%s0 + $0x94] sm:$0xf]
    %v60 = vld [vmem:[%s0 + $0x98] sm:$0xf]
    %v61 = vld [vmem:[%s0 + $0x9c] sm:$0xf]
    %v62 = vld [vmem:[%s0 + $0xa0] sm:$0xf]
    %v63 = vld [vmem:[%s0 + $0xa4] sm:$0xf]
    %v64 = vld [vmem:[%s0 + $0xa8] sm:$0xf]
    %v65 = vld [vmem:[%s0 + $0xac] sm:$0xf]
    %v66 = vld [vmem:[%s0 + $0xb0] sm:$0xf]
    %v67 = vld [vmem:[%s0 + $0xb4] sm:$0xf]
    %v68 = vld [vmem:[%s0 + $0xb8] sm:$0xf]
    %v69 = vld [vmem:[%s0 + $0xbc] sm:$0xf]
    %v70 = vld [vmem:[%s0 + $0xc0] sm:$0xf]
    %v71 = vld [vmem:[%s0 + $0xc4] sm:$0xf]
    %v72 = vld [vmem:[%s0 + $0xc8] sm:$0xf]
    %v73 = vld [vmem:[%s0 + $0xcc] sm:$0xf]
    %v74 = vld [vmem:[%s0 + $0xd0] sm:$0xf]
    %v75 = vld [vmem:[%s0 + $0xd4] sm:$0xf]
    %v76 = vld [vmem:[%s0 + $0xd8] sm:$0xf]
    %v77 = vld [vmem:[%s0 + $0xdc] sm:$0xf]
    %v78 = vld [vmem:[%s0 + $0xe0] sm:$0xf]
    %v79 = vld [vmem:[%s0 + $0xe4] sm:$0xf]
    %v80 = vld [vmem:[%s0 + $0xe8] sm:$0xf]
    %v81 = vld [vmem:[%s0 + $0xec] sm:$0xf]
    %v82 = vld [vmem:[%s0 + $0xf0] sm:$0xf]
    %v83 = vld [vmem:[%s0 + $0xf4] sm:$0xf]
    %v84 = vld [vmem:[%s0 + $0xf8] sm:$0xf]
    %v85 = vld [vmem:[%s0 + $0xfc] sm:$0xf]
    %v86 = vld [vmem:[%s1] sm:$0xf]
    %v87 = vld [vmem:[%s1 + $0x4] sm:$0xf]
    %v88 = vld [vmem:[%s1 + $0x8] sm:$0xf]
    %v89 = vld [vmem:[%s1 + $0xc] sm:$0xf]
    %v90 = vld [vmem:[%s2] sm:$0x1]
    %v92 = vlaneseq
    %v93 = vshrl.u32 %v92, 7
    %v94 = vsub.s32 0, %v93
    %v95 = vrot.slane %v90, %v94
    %v161 = vunpack.c.l.b16 %v22
    %v162 = vunpack.c.l.b16 %v23
    %v163 = vunpack.c.l.b16 %v24
    %v164 = vunpack.c.l.b16 %v25
    %v165 = vunpack.c.l.b16 %v26
    %v166 = vunpack.c.l.b16 %v27
    %v167 = vunpack.c.l.b16 %v28
    %v168 = vunpack.c.l.b16 %v29
    %v169 = vunpack.c.l.b16 %v30
    %v170 = vunpack.c.l.b16 %v31
    %v171 = vunpack.c.l.b16 %v32
    %v172 = vunpack.c.l.b16 %v33
    %v173 = vunpack.c.l.b16 %v34
    %v174 = vunpack.c.l.b16 %v35
    %v175 = vunpack.c.l.b16 %v36
    %v176 = vunpack.c.l.b16 %v37
    %v177 = vunpack.c.l.b16 %v38
    %v178 = vunpack.c.l.b16 %v39
    %v179 = vunpack.c.l.b16 %v40
    %v180 = vunpack.c.l.b16 %v41
    %v181 = vunpack.c.l.b16 %v42
    %v182 = vunpack.c.l.b16 %v43
    %v183 = vunpack.c.l.b16 %v44
    %v184 = vunpack.c.l.b16 %v45
    %v185 = vunpack.c.l.b16 %v46
    %v186 = vunpack.c.l.b16 %v47
    %v187 = vunpack.c.l.b16 %v48
    %v188 = vunpack.c.l.b16 %v49
    %v189 = vunpack.c.l.b16 %v50
    %v190 = vunpack.c.l.b16 %v51
    %v191 = vunpack.c.l.b16 %v52
    %v192 = vunpack.c.l.b16 %v53
    %v193 = vunpack.c.l.b16 %v54
    %v194 = vunpack.c.l.b16 %v55
    %v195 = vunpack.c.l.b16 %v56
    %v196 = vunpack.c.l.b16 %v57
    %v197 = vunpack.c.l.b16 %v58
    %v198 = vunpack.c.l.b16 %v59
    %v199 = vunpack.c.l.b16 %v60
    %v200 = vunpack.c.l.b16 %v61
    %v201 = vunpack.c.l.b16 %v62
    %v202 = vunpack.c.l.b16 %v63
    %v203 = vunpack.c.l.b16 %v64
    %v204 = vunpack.c.l.b16 %v65
    %v205 = vunpack.c.l.b16 %v66
    %v206 = vunpack.c.l.b16 %v67
    %v207 = vunpack.c.l.b16 %v68
    %v208 = vunpack.c.l.b16 %v69
    %v209 = vunpack.c.l.b16 %v70
    %v210 = vunpack.c.l.b16 %v71
    %v211 = vunpack.c.l.b16 %v72
    %v212 = vunpack.c.l.b16 %v73
    %v213 = vunpack.c.l.b16 %v74
    %v214 = vunpack.c.l.b16 %v75
    %v215 = vunpack.c.l.b16 %v76
    %v216 = vunpack.c.l.b16 %v77
    %v217 = vunpack.c.l.b16 %v78
    %v218 = vunpack.c.l.b16 %v79
    %v219 = vunpack.c.l.b16 %v80
    %v220 = vunpack.c.l.b16 %v81
    %v221 = vunpack.c.l.b16 %v82
    %v222 = vunpack.c.l.b16 %v83
    %v223 = vunpack.c.l.b16 %v84
    %v224 = vunpack.c.l.b16 %v85
    %v225 = vpack.c.b16 %v162, %v161
    %v226 = vpack.c.b16 %v164, %v163
    %v227 = vpack.c.b16 %v166, %v165
    %v228 = vpack.c.b16 %v168, %v167
    %v229 = vpack.c.b16 %v170, %v169
    %v230 = vpack.c.b16 %v172, %v171
    %v231 = vpack.c.b16 %v174, %v173
    %v232 = vpack.c.b16 %v176, %v175
    %v233 = vpack.c.b16 %v178, %v177
    %v234 = vpack.c.b16 %v180, %v179
    %v235 = vpack.c.b16 %v182, %v181
    %v236 = vpack.c.b16 %v184, %v183
    %v237 = vpack.c.b16 %v186, %v185
    %v238 = vpack.c.b16 %v188, %v187
    %v239 = vpack.c.b16 %v190, %v189
    %v240 = vpack.c.b16 %v192, %v191
    %v241 = vpack.c.b16 %v194, %v193
    %v242 = vpack.c.b16 %v196, %v195
    %v243 = vpack.c.b16 %v198, %v197
    %v244 = vpack.c.b16 %v200, %v199
    %v245 = vpack.c.b16 %v202, %v201
    %v246 = vpack.c.b16 %v204, %v203
    %v247 = vpack.c.b16 %v206, %v205
    %v248 = vpack.c.b16 %v208, %v207
    %v249 = vpack.c.b16 %v210, %v209
    %v250 = vpack.c.b16 %v212, %v211
    %v251 = vpack.c.b16 %v214, %v213
    %v252 = vpack.c.b16 %v216, %v215
    %v253 = vpack.c.b16 %v218, %v217
    %v254 = vpack.c.b16 %v220, %v219
    %v255 = vpack.c.b16 %v222, %v221
    %v256 = vpack.c.b16 %v224, %v223
    %v261 = vunpack.c.l.b16 %v86
    %v262 = vunpack.c.l.b16 %v87
    %v263 = vunpack.c.l.b16 %v88
    %v264 = vunpack.c.l.b16 %v89
    %v265 = vpack.c.b16 %v262, %v261
    %v266 = vpack.c.b16 %v264, %v263
    %vm269 = vcmask 261120
    %v271 = vsel %vm269, %v225, 0
    %v274 = vsel %vm269, %v226, 0
    %v277 = vsel %vm269, %v227, 0
    %v280 = vsel %vm269, %v228, 0
    %v283 = vsel %vm269, %v229, 0
    %v286 = vsel %vm269, %v230, 0
    %v289 = vsel %vm269, %v231, 0
    %v292 = vsel %vm269, %v232, 0
    %v295 = vsel %vm269, %v233, 0
    %v298 = vsel %vm269, %v234, 0
    %v301 = vsel %vm269, %v235, 0
    %v304 = vsel %vm269, %v236, 0
    %v307 = vsel %vm269, %v237, 0
    %v310 = vsel %vm269, %v238, 0
    %v313 = vsel %vm269, %v239, 0
    %v316 = vsel %vm269, %v240, 0
    %v319 = vsel %vm269, %v241, 0
    %v322 = vsel %vm269, %v242, 0
    %v325 = vsel %vm269, %v243, 0
    %v328 = vsel %vm269, %v244, 0
    %v331 = vsel %vm269, %v245, 0
    %v334 = vsel %vm269, %v246, 0
    %v337 = vsel %vm269, %v247, 0
    %v340 = vsel %vm269, %v248, 0
    %v343 = vsel %vm269, %v249, 0
    %v346 = vsel %vm269, %v250, 0
    %v349 = vsel %vm269, %v251, 0
    %v352 = vsel %vm269, %v252, 0
    %v355 = vsel %vm269, %v253, 0
    %v358 = vsel %vm269, %v254, 0
    %v361 = vsel %vm269, %v255, 0
    %v364 = vsel %vm269, %v256, 0
    %366 = vmatprep.subr.bf16.mxu0 0
    %367 = vmatpush1.bf16.msra.mxu0 %v265
    %368 = vmatprep.subr.bf16.mxu0 0
    %369 = vmatpush1.bf16.msra.mxu0 %v266
    %370 = vmatprep.subr.bf16.mxu0 0
    %371 = vmatpush1.bf16.msra.mxu0 0
    %372 = vmatprep.subr.bf16.mxu0 0
    %373 = vmatpush1.bf16.msra.mxu0 0
    %374 = vmatprep.subr.bf16.mxu0 0
    %375 = vmatpush1.bf16.msra.mxu0 0
    %376 = vmatprep.subr.bf16.mxu0 0
    %377 = vmatpush1.bf16.msra.mxu0 0
    %378 = vmatprep.subr.bf16.mxu0 0
    %379 = vmatpush1.bf16.msra.mxu0 0
    %380 = vmatprep.subr.bf16.mxu0 0
    %381 = vmatpush1.bf16.msra.mxu0 0
    %382 = vmatprep.subr.bf16.mxu0 0
    %383 = vmatpush1.bf16.msra.mxu0 0
    %384 = vmatprep.subr.bf16.mxu0 0
    %385 = vmatpush1.bf16.msra.mxu0 0
    %386 = vmatprep.subr.bf16.mxu0 0
    %387 = vmatpush1.bf16.msra.mxu0 0
    %388 = vmatprep.subr.bf16.mxu0 0
    %389 = vmatpush1.bf16.msra.mxu0 0
    %390 = vmatprep.subr.bf16.mxu0 0
    %391 = vmatpush1.bf16.msra.mxu0 0
    %392 = vmatprep.subr.bf16.mxu0 0
    %393 = vmatpush1.bf16.msra.mxu0 0
    %394 = vmatprep.subr.bf16.mxu0 0
    %395 = vmatpush1.bf16.msra.mxu0 0
    %396 = vmatprep.subr.bf16.mxu0 0
    %397 = vmatpush1.bf16.msra.mxu0 0
    %398 = vmatprep.mubr.bf16.mxu0 0
    %399 = vmatmul.mubr.bf16.gmra.mrb[0].mxu0 %v271
    %v400 = vpop.f32.mrb[0].mxu0
    %v401 = vadd.f32 %v95, %v400
    %v402 = vpop.f32.mrb[0].mxu0
    %v403 = vpop.f32.mrb[0].mxu0
    %v404 = vadd.f32 %v95, %v403
    %v405 = vpop.f32.mrb[0].mxu0
    %406 = vmatprep.mubr.bf16.mxu0 0
    %407 = vmatmul.mubr.bf16.gmra.mrb[0].mxu0 %v274
    %v408 = vpop.f32.mrb[0].mxu0
    %v409 = vadd.f32 %v95, %v408
    %v410 = vpop.f32.mrb[0].mxu0
    %v411 = vpop.f32.mrb[0].mxu0
    %v412 = vadd.f32 %v95, %v411
    %v413 = vpop.f32.mrb[0].mxu0
    %414 = vmatprep.mubr.bf16.mxu0 0
    %415 = vmatmul.mubr.bf16.gmra.mrb[0].mxu0 %v277
    %v416 = vpop.f32.mrb[0].mxu0
    %v417 = vadd.f32 %v95, %v416
    %v418 = vpop.f32.mrb[0].mxu0
    %v419 = vpop.f32.mrb[0].mxu0
    %v420 = vadd.f32 %v95, %v419
    %v421 = vpop.f32.mrb[0].mxu0
    %422 = vmatprep.mubr.bf16.mxu0 0
    %423 = vmatmul.mubr.bf16.gmra.mrb[0].mxu0 %v280
    %v424 = vpop.f32.mrb[0].mxu0
    %v425 = vadd.f32 %v95, %v424
    %v426 = vpop.f32.mrb[0].mxu0
    %v427 = vpop.f32.mrb[0].mxu0
    %v428 = vadd.f32 %v95, %v427
    %v429 = vpop.f32.mrb[0].mxu0
    %430 = vmatprep.mubr.bf16.mxu0 0
    %431 = vmatmul.mubr.bf16.gmra.mrb[0].mxu0 %v283
    %v432 = vpop.f32.mrb[0].mxu0
    %v433 = vadd.f32 %v95, %v432
    %v434 = vpop.f32.mrb[0].mxu0
    %v435 = vpop.f32.mrb[0].mxu0
    %v436 = vadd.f32 %v95, %v435
    %v437 = vpop.f32.mrb[0].mxu0
    %438 = vmatprep.mubr.bf16.mxu0 0
    %439 = vmatmul.mubr.bf16.gmra.mrb[0].mxu0 %v286
    %v440 = vpop.f32.mrb[0].mxu0
    %v441 = vadd.f32 %v95, %v440
    %v442 = vpop.f32.mrb[0].mxu0
    %v443 = vpop.f32.mrb[0].mxu0
    %v444 = vadd.f32 %v95, %v443
    %v445 = vpop.f32.mrb[0].mxu0
    %446 = vmatprep.mubr.bf16.mxu0 0
    %447 = vmatmul.mubr.bf16.gmra.mrb[0].mxu0 %v289
    %v448 = vpop.f32.mrb[0].mxu0
    %v449 = vadd.f32 %v95, %v448
    %v450 = vpop.f32.mrb[0].mxu0
    %v451 = vpop.f32.mrb[0].mxu0
    %v452 = vadd.f32 %v95, %v451
    %v453 = vpop.f32.mrb[0].mxu0
    %454 = vmatprep.mubr.bf16.mxu0 0
    %455 = vmatmul.mubr.bf16.gmra.mrb[0].mxu0 %v292
    %v456 = vpop.f32.mrb[0].mxu0
    %v457 = vadd.f32 %v95, %v456
    %v458 = vpop.f32.mrb[0].mxu0
    %v459 = vpop.f32.mrb[0].mxu0
    %v460 = vadd.f32 %v95, %v459
    %v461 = vpop.f32.mrb[0].mxu0
    %462 = vmatprep.mubr.bf16.mxu0 0
    %463 = vmatmul.mubr.bf16.gmra.mrb[0].mxu0 %v295
    %v464 = vpop.f32.mrb[0].mxu0
    %v465 = vadd.f32 %v95, %v464
    %v466 = vpop.f32.mrb[0].mxu0
    %v467 = vpop.f32.mrb[0].mxu0
    %v468 = vadd.f32 %v95, %v467
    %v469 = vpop.f32.mrb[0].mxu0
    %470 = vmatprep.mubr.bf16.mxu0 0
    %471 = vmatmul.mubr.bf16.gmra.mrb[0].mxu0 %v298
    %v472 = vpop.f32.mrb[0].mxu0
    %v473 = vadd.f32 %v95, %v472
    %v474 = vpop.f32.mrb[0].mxu0
    %v475 = vpop.f32.mrb[0].mxu0
    %v476 = vadd.f32 %v95, %v475
    %v477 = vpop.f32.mrb[0].mxu0
    %478 = vmatprep.mubr.bf16.mxu0 0
    %479 = vmatmul.mubr.bf16.gmra.mrb[0].mxu0 %v301
    %v480 = vpop.f32.mrb[0].mxu0
    %v481 = vadd.f32 %v95, %v480
    %v482 = vpop.f32.mrb[0].mxu0
    %v483 = vpop.f32.mrb[0].mxu0
    %v484 = vadd.f32 %v95, %v483
    %v485 = vpop.f32.mrb[0].mxu0
    %486 = vmatprep.mubr.bf16.mxu0 0
    %487 = vmatmul.mubr.bf16.gmra.mrb[0].mxu0 %v304
    %v488 = vpop.f32.mrb[0].mxu0
    %v489 = vadd.f32 %v95, %v488
    %v490 = vpop.f32.mrb[0].mxu0
    %v491 = vpop.f32.mrb[0].mxu0
    %v492 = vadd.f32 %v95, %v491
    %v493 = vpop.f32.mrb[0].mxu0
    %494 = vmatprep.mubr.bf16.mxu0 0
    %495 = vmatmul.mubr.bf16.gmra.mrb[0].mxu0 %v307
    %v496 = vpop.f32.mrb[0].mxu0
    %v497 = vadd.f32 %v95, %v496
    %v498 = vpop.f32.mrb[0].mxu0
    %v499 = vpop.f32.mrb[0].mxu0
    %v500 = vadd.f32 %v95, %v499
    %v501 = vpop.f32.mrb[0].mxu0
    %502 = vmatprep.mubr.bf16.mxu0 0
    %503 = vmatmul.mubr.bf16.gmra.mrb[0].mxu0 %v310
    %v504 = vpop.f32.mrb[0].mxu0
    %v505 = vadd.f32 %v95, %v504
    %v506 = vpop.f32.mrb[0].mxu0
    %v507 = vpop.f32.mrb[0].mxu0
    %v508 = vadd.f32 %v95, %v507
    %v509 = vpop.f32.mrb[0].mxu0
    %510 = vmatprep.mubr.bf16.mxu0 0
    %511 = vmatmul.mubr.bf16.gmra.mrb[0].mxu0 %v313
    %v512 = vpop.f32.mrb[0].mxu0
    %v513 = vadd.f32 %v95, %v512
    %v514 = vpop.f32.mrb[0].mxu0
    %v515 = vpop.f32.mrb[0].mxu0
    %v516 = vadd.f32 %v95, %v515
    %v517 = vpop.f32.mrb[0].mxu0
    %518 = vmatprep.mubr.bf16.mxu0 0
    %519 = vmatmul.mubr.bf16.gmra.mrb[0].mxu0 %v316
    %v520 = vpop.f32.mrb[0].mxu0
    %v521 = vadd.f32 %v95, %v520
    %v522 = vpop.f32.mrb[0].mxu0
    %v523 = vpop.f32.mrb[0].mxu0
    %v524 = vadd.f32 %v95, %v523
    %v525 = vpop.f32.mrb[0].mxu0
    %526 = vmatprep.mubr.bf16.mxu0 0
    %527 = vmatmul.mubr.bf16.gmra.mrb[0].mxu0 %v319
    %v528 = vpop.f32.mrb[0].mxu0
    %v529 = vadd.f32 %v95, %v528
    %v530 = vpop.f32.mrb[0].mxu0
    %v531 = vpop.f32.mrb[0].mxu0
    %v532 = vadd.f32 %v95, %v531
    %v533 = vpop.f32.mrb[0].mxu0
    %534 = vmatprep.mubr.bf16.mxu0 0
    %535 = vmatmul.mubr.bf16.gmra.mrb[0].mxu0 %v322
    %v536 = vpop.f32.mrb[0].mxu0
    %v537 = vadd.f32 %v95, %v536
    %v538 = vpop.f32.mrb[0].mxu0
    %v539 = vpop.f32.mrb[0].mxu0
    %v540 = vadd.f32 %v95, %v539
    %v541 = vpop.f32.mrb[0].mxu0
    %542 = vmatprep.mubr.bf16.mxu0 0
    %543 = vmatmul.mubr.bf16.gmra.mrb[0].mxu0 %v325
    %v544 = vpop.f32.mrb[0].mxu0
    %v545 = vadd.f32 %v95, %v544
    %v546 = vpop.f32.mrb[0].mxu0
    %v547 = vpop.f32.mrb[0].mxu0
    %v548 = vadd.f32 %v95, %v547
    %v549 = vpop.f32.mrb[0].mxu0
    %550 = vmatprep.mubr.bf16.mxu0 0
    %551 = vmatmul.mubr.bf16.gmra.mrb[0].mxu0 %v328
    %v552 = vpop.f32.mrb[0].mxu0
    %v553 = vadd.f32 %v95, %v552
    %v554 = vpop.f32.mrb[0].mxu0
    %v555 = vpop.f32.mrb[0].mxu0
    %v556 = vadd.f32 %v95, %v555
    %v557 = vpop.f32.mrb[0].mxu0
    %558 = vmatprep.mubr.bf16.mxu0 0
    %559 = vmatmul.mubr.bf16.gmra.mrb[0].mxu0 %v331
    %v560 = vpop.f32.mrb[0].mxu0
    %v561 = vadd.f32 %v95, %v560
    %v562 = vpop.f32.mrb[0].mxu0
    %v563 = vpop.f32.mrb[0].mxu0
    %v564 = vadd.f32 %v95, %v563
    %v565 = vpop.f32.mrb[0].mxu0
    %566 = vmatprep.mubr.bf16.mxu0 0
    %567 = vmatmul.mubr.bf16.gmra.mrb[0].mxu0 %v334
    %v568 = vpop.f32.mrb[0].mxu0
    %v569 = vadd.f32 %v95, %v568
    %v570 = vpop.f32.mrb[0].mxu0
    %v571 = vpop.f32.mrb[0].mxu0
    %v572 = vadd.f32 %v95, %v571
    %v573 = vpop.f32.mrb[0].mxu0
    %574 = vmatprep.mubr.bf16.mxu0 0
    %575 = vmatmul.mubr.bf16.gmra.mrb[0].mxu0 %v337
    %v576 = vpop.f32.mrb[0].mxu0
    %v577 = vadd.f32 %v95, %v576
    %v578 = vpop.f32.mrb[0].mxu0
    %v579 = vpop.f32.mrb[0].mxu0
    %v580 = vadd.f32 %v95, %v579
    %v581 = vpop.f32.mrb[0].mxu0
    %582 = vmatprep.mubr.bf16.mxu0 0
    %583 = vmatmul.mubr.bf16.gmra.mrb[0].mxu0 %v340
    %v584 = vpop.f32.mrb[0].mxu0
    %v585 = vadd.f32 %v95, %v584
    %v586 = vpop.f32.mrb[0].mxu0
    %v587 = vpop.f32.mrb[0].mxu0
    %v588 = vadd.f32 %v95, %v587
    %v589 = vpop.f32.mrb[0].mxu0
    %590 = vmatprep.mubr.bf16.mxu0 0
    %591 = vmatmul.mubr.bf16.gmra.mrb[0].mxu0 %v343
    %v592 = vpop.f32.mrb[0].mxu0
    %v593 = vadd.f32 %v95, %v592
    %v594 = vpop.f32.mrb[0].mxu0
    %v595 = vpop.f32.mrb[0].mxu0
    %v596 = vadd.f32 %v95, %v595
    %v597 = vpop.f32.mrb[0].mxu0
    %598 = vmatprep.mubr.bf16.mxu0 0
    %599 = vmatmul.mubr.bf16.gmra.mrb[0].mxu0 %v346
    %v600 = vpop.f32.mrb[0].mxu0
    %v601 = vadd.f32 %v95, %v600
    %v602 = vpop.f32.mrb[0].mxu0
    %v603 = vpop.f32.mrb[0].mxu0
    %v604 = vadd.f32 %v95, %v603
    %v605 = vpop.f32.mrb[0].mxu0
    %606 = vmatprep.mubr.bf16.mxu0 0
    %607 = vmatmul.mubr.bf16.gmra.mrb[0].mxu0 %v349
    %v608 = vpop.f32.mrb[0].mxu0
    %v609 = vadd.f32 %v95, %v608
    %v610 = vpop.f32.mrb[0].mxu0
    %v611 = vpop.f32.mrb[0].mxu0
    %v612 = vadd.f32 %v95, %v611
    %v613 = vpop.f32.mrb[0].mxu0
    %614 = vmatprep.mubr.bf16.mxu0 0
    %615 = vmatmul.mubr.bf16.gmra.mrb[0].mxu0 %v352
    %v616 = vpop.f32.mrb[0].mxu0
    %v617 = vadd.f32 %v95, %v616
    %v618 = vpop.f32.mrb[0].mxu0
    %v619 = vpop.f32.mrb[0].mxu0
    %v620 = vadd.f32 %v95, %v619
    %v621 = vpop.f32.mrb[0].mxu0
    %622 = vmatprep.mubr.bf16.mxu0 0
    %623 = vmatmul.mubr.bf16.gmra.mrb[0].mxu0 %v355
    %v624 = vpop.f32.mrb[0].mxu0
    %v625 = vadd.f32 %v95, %v624
    %v626 = vpop.f32.mrb[0].mxu0
    %v627 = vpop.f32.mrb[0].mxu0
    %v628 = vadd.f32 %v95, %v627
    %v629 = vpop.f32.mrb[0].mxu0
    %630 = vmatprep.mubr.bf16.mxu0 0
    %631 = vmatmul.mubr.bf16.gmra.mrb[0].mxu0 %v358
    %v632 = vpop.f32.mrb[0].mxu0
    %v633 = vadd.f32 %v95, %v632
    %v634 = vpop.f32.mrb[0].mxu0
    %v635 = vpop.f32.mrb[0].mxu0
    %v636 = vadd.f32 %v95, %v635
    %v637 = vpop.f32.mrb[0].mxu0
    %638 = vmatprep.mubr.bf16.mxu0 0
    %639 = vmatmul.mubr.bf16.gmra.mrb[0].mxu0 %v361
    %v640 = vpop.f32.mrb[0].mxu0
    %v641 = vadd.f32 %v95, %v640
    %v642 = vpop.f32.mrb[0].mxu0
    %v643 = vpop.f32.mrb[0].mxu0
    %v644 = vadd.f32 %v95, %v643
    %v645 = vpop.f32.mrb[0].mxu0
    %646 = vmatprep.mubr.bf16.mxu0 0
    %647 = vmatmul.mubr.bf16.gmra.mrb[0].mxu0 %v364
    %v648 = vpop.f32.mrb[0].mxu0
    %v649 = vadd.f32 %v95, %v648
    %v650 = vpop.f32.mrb[0].mxu0
    %v651 = vpop.f32.mrb[0].mxu0
    %v652 = vadd.f32 %v95, %v651
    %v653 = vpop.f32.mrb[0].mxu0
    %654 = vdwg.mxu0
    %v655 = vtanh.pop %v401
    %v656 = vtanh.pop %v404
    %v657 = vtanh.pop %v409
    %v658 = vtanh.pop %v412
    %v659 = vtanh.pop %v417
    %v660 = vtanh.pop %v420
    %v661 = vtanh.pop %v425
    %v662 = vtanh.pop %v428
    %v663 = vtanh.pop %v433
    %v664 = vtanh.pop %v436
    %v665 = vtanh.pop %v441
    %v666 = vtanh.pop %v444
    %v667 = vtanh.pop %v449
    %v668 = vtanh.pop %v452
    %v669 = vtanh.pop %v457
    %v670 = vtanh.pop %v460
    %v671 = vtanh.pop %v465
    %v672 = vtanh.pop %v468
    %v673 = vtanh.pop %v473
    %v674 = vtanh.pop %v476
    %v675 = vtanh.pop %v481
    %v676 = vtanh.pop %v484
    %v677 = vtanh.pop %v489
    %v678 = vtanh.pop %v492
    %v679 = vtanh.pop %v497
    %v680 = vtanh.pop %v500
    %v681 = vtanh.pop %v505
    %v682 = vtanh.pop %v508
    %v683 = vtanh.pop %v513
    %v684 = vtanh.pop %v516
    %v685 = vtanh.pop %v521
    %v686 = vtanh.pop %v524
    %v687 = vtanh.pop %v529
    %v688 = vtanh.pop %v532
    %v689 = vtanh.pop %v537
    %v690 = vtanh.pop %v540
    %v691 = vtanh.pop %v545
    %v692 = vtanh.pop %v548
    %v693 = vtanh.pop %v553
    %v694 = vtanh.pop %v556
    %v695 = vtanh.pop %v561
    %v696 = vtanh.pop %v564
    %v697 = vtanh.pop %v569
    %v698 = vtanh.pop %v572
    %v699 = vtanh.pop %v577
    %v700 = vtanh.pop %v580
    %v701 = vtanh.pop %v585
    %v702 = vtanh.pop %v588
    %v703 = vtanh.pop %v593
    %v704 = vtanh.pop %v596
    %v705 = vtanh.pop %v601
    %v706 = vtanh.pop %v604
    %v707 = vtanh.pop %v609
    %v708 = vtanh.pop %v612
    %v709 = vtanh.pop %v617
    %v710 = vtanh.pop %v620
    %v711 = vtanh.pop %v625
    %v712 = vtanh.pop %v628
    %v713 = vtanh.pop %v633
    %v714 = vtanh.pop %v636
    %v715 = vtanh.pop %v641
    %v716 = vtanh.pop %v644
    %v717 = vtanh.pop %v649
    %v718 = vtanh.pop %v652
    %v719 = vpack.c.bf16 %v656, %v655
    %v720 = vpack.c.bf16 %v658, %v657
    %v721 = vpack.c.bf16 %v660, %v659
    %v722 = vpack.c.bf16 %v662, %v661
    %v723 = vpack.c.bf16 %v664, %v663
    %v724 = vpack.c.bf16 %v666, %v665
    %v725 = vpack.c.bf16 %v668, %v667
    %v726 = vpack.c.bf16 %v670, %v669
    %v727 = vpack.c.bf16 %v672, %v671
    %v728 = vpack.c.bf16 %v674, %v673
    %v729 = vpack.c.bf16 %v676, %v675
    %v730 = vpack.c.bf16 %v678, %v677
    %v731 = vpack.c.bf16 %v680, %v679
    %v732 = vpack.c.bf16 %v682, %v681
    %v733 = vpack.c.bf16 %v684, %v683
    %v734 = vpack.c.bf16 %v686, %v685
    %v735 = vpack.c.bf16 %v688, %v687
    %v736 = vpack.c.bf16 %v690, %v689
    %v737 = vpack.c.bf16 %v692, %v691
    %v738 = vpack.c.bf16 %v694, %v693
    %v739 = vpack.c.bf16 %v696, %v695
    %v740 = vpack.c.bf16 %v698, %v697
    %v741 = vpack.c.bf16 %v700, %v699
    %v742 = vpack.c.bf16 %v702, %v701
    %v743 = vpack.c.bf16 %v704, %v703
    %v744 = vpack.c.bf16 %v706, %v705
    %v745 = vpack.c.bf16 %v708, %v707
    %v746 = vpack.c.bf16 %v710, %v709
    %v747 = vpack.c.bf16 %v712, %v711
    %v748 = vpack.c.bf16 %v714, %v713
    %v749 = vpack.c.bf16 %v716, %v715
    %v750 = vpack.c.bf16 %v718, %v717
    %v751 = vld [vmem:[%s3] sm:$0xf]
    %v752 = vld [vmem:[%s3 + $0x4] sm:$0xf]
    %v753 = vld [vmem:[%s3 + $0x8] sm:$0xf]
    %v754 = vld [vmem:[%s3 + $0xc] sm:$0xf]
    %v755 = vld [vmem:[%s3 + $0x10] sm:$0xf]
    %v756 = vld [vmem:[%s3 + $0x14] sm:$0xf]
    %v757 = vld [vmem:[%s3 + $0x18] sm:$0xf]
    %v758 = vld [vmem:[%s3 + $0x1c] sm:$0xf]
    %v759 = vld [vmem:[%s4] sm:$0x1]
    %v761 = vlaneseq
    %v762 = vshrl.u32 %v761, 7
    %v763 = vsub.s32 0, %v762
    %v764 = vrot.slane %v759, %v763
    %v774 = vunpack.c.l.b16 %v751
    %v775 = vunpack.c.l.b16 %v752
    %v776 = vunpack.c.l.b16 %v753
    %v777 = vunpack.c.l.b16 %v754
    %v778 = vunpack.c.l.b16 %v755
    %v779 = vunpack.c.l.b16 %v756
    %v780 = vunpack.c.l.b16 %v757
    %v781 = vunpack.c.l.b16 %v758
    %v782 = vpack.c.b16 %v775, %v774
    %v783 = vpack.c.b16 %v777, %v776
    %v784 = vpack.c.b16 %v779, %v778
    %v785 = vpack.c.b16 %v781, %v780
    %vm790 = vcmask 523264
    %v792 = vsel %vm790, %v719, 0
    %v795 = vsel %vm790, %v720, 0
    %v798 = vsel %vm790, %v721, 0
    %v801 = vsel %vm790, %v722, 0
    %v804 = vsel %vm790, %v723, 0
    %v807 = vsel %vm790, %v724, 0
    %v810 = vsel %vm790, %v725, 0
    %v813 = vsel %vm790, %v726, 0
    %v816 = vsel %vm790, %v727, 0
    %v819 = vsel %vm790, %v728, 0
    %v822 = vsel %vm790, %v729, 0
    %v825 = vsel %vm790, %v730, 0
    %v828 = vsel %vm790, %v731, 0
    %v831 = vsel %vm790, %v732, 0
    %v834 = vsel %vm790, %v733, 0
    %v837 = vsel %vm790, %v734, 0
    %v840 = vsel %vm790, %v735, 0
    %v843 = vsel %vm790, %v736, 0
    %v846 = vsel %vm790, %v737, 0
    %v849 = vsel %vm790, %v738, 0
    %v852 = vsel %vm790, %v739, 0
    %v855 = vsel %vm790, %v740, 0
    %v858 = vsel %vm790, %v741, 0
    %v861 = vsel %vm790, %v742, 0
    %v864 = vsel %vm790, %v743, 0
    %v867 = vsel %vm790, %v744, 0
    %v870 = vsel %vm790, %v745, 0
    %v873 = vsel %vm790, %v746, 0
    %v876 = vsel %vm790, %v747, 0
    %v879 = vsel %vm790, %v748, 0
    %v882 = vsel %vm790, %v749, 0
    %v885 = vsel %vm790, %v750, 0
    %887 = vmatprep.subr.bf16.mxu0 0
    %888 = vmatpush1.bf16.msra.mxu0 %v782
    %889 = vmatprep.subr.bf16.mxu0 0
    %890 = vmatpush1.bf16.msra.mxu0 %v783
    %891 = vmatprep.subr.bf16.mxu0 0
    %892 = vmatpush1.bf16.msra.mxu0 %v784
    %893 = vmatprep.subr.bf16.mxu0 0
    %894 = vmatpush1.bf16.msra.mxu0 %v785
    %895 = vmatprep.subr.bf16.mxu0 0
    %896 = vmatpush1.bf16.msra.mxu0 0
    %897 = vmatprep.subr.bf16.mxu0 0
    %898 = vmatpush1.bf16.msra.mxu0 0
    %899 = vmatprep.subr.bf16.mxu0 0
    %900 = vmatpush1.bf16.msra.mxu0 0
    %901 = vmatprep.subr.bf16.mxu0 0
    %902 = vmatpush1.bf16.msra.mxu0 0
    %903 = vmatprep.subr.bf16.mxu0 0
    %904 = vmatpush1.bf16.msra.mxu0 0
    %905 = vmatprep.subr.bf16.mxu0 0
    %906 = vmatpush1.bf16.msra.mxu0 0
    %907 = vmatprep.subr.bf16.mxu0 0
    %908 = vmatpush1.bf16.msra.mxu0 0
    %909 = vmatprep.subr.bf16.mxu0 0
    %910 = vmatpush1.bf16.msra.mxu0 0
    %911 = vmatprep.subr.bf16.mxu0 0
    %912 = vmatpush1.bf16.msra.mxu0 0
    %913 = vmatprep.subr.bf16.mxu0 0
    %914 = vmatpush1.bf16.msra.mxu0 0
    %915 = vmatprep.subr.bf16.mxu0 0
    %916 = vmatpush1.bf16.msra.mxu0 0
    %917 = vmatprep.subr.bf16.mxu0 0
    %918 = vmatpush1.bf16.msra.mxu0 0
    %919 = vmatprep.mubr.bf16.mxu0 0
    %920 = vmatmul.mubr.bf16.gmra.mrb[0].mxu0 %v792
    %v921 = vpop.f32.mrb[0].mxu0
    %v922 = vadd.f32 %v764, %v921
    %v923 = vpop.f32.mrb[0].mxu0
    %v924 = vpop.f32.mrb[0].mxu0
    %v925 = vadd.f32 %v764, %v924
    %v926 = vpop.f32.mrb[0].mxu0
    %927 = vmatprep.mubr.bf16.mxu0 0
    %928 = vmatmul.mubr.bf16.gmra.mrb[0].mxu0 %v795
    %v929 = vpop.f32.mrb[0].mxu0
    %v930 = vadd.f32 %v764, %v929
    %v931 = vpop.f32.mrb[0].mxu0
    %v932 = vpop.f32.mrb[0].mxu0
    %v933 = vadd.f32 %v764, %v932
    %v934 = vpop.f32.mrb[0].mxu0
    %935 = vmatprep.mubr.bf16.mxu0 0
    %936 = vmatmul.mubr.bf16.gmra.mrb[0].mxu0 %v798
    %v937 = vpop.f32.mrb[0].mxu0
    %v938 = vadd.f32 %v764, %v937
    %v939 = vpop.f32.mrb[0].mxu0
    %v940 = vpop.f32.mrb[0].mxu0
    %v941 = vadd.f32 %v764, %v940
    %v942 = vpop.f32.mrb[0].mxu0
    %943 = vmatprep.mubr.bf16.mxu0 0
    %944 = vmatmul.mubr.bf16.gmra.mrb[0].mxu0 %v801
    %v945 = vpop.f32.mrb[0].mxu0
    %v946 = vadd.f32 %v764, %v945
    %v947 = vpop.f32.mrb[0].mxu0
    %v948 = vpop.f32.mrb[0].mxu0
    %v949 = vadd.f32 %v764, %v948
    %v950 = vpop.f32.mrb[0].mxu0
    %951 = vmatprep.mubr.bf16.mxu0 0
    %952 = vmatmul.mubr.bf16.gmra.mrb[0].mxu0 %v804
    %v953 = vpop.f32.mrb[0].mxu0
    %v954 = vadd.f32 %v764, %v953
    %v955 = vpop.f32.mrb[0].mxu0
    %v956 = vpop.f32.mrb[0].mxu0
    %v957 = vadd.f32 %v764, %v956
    %v958 = vpop.f32.mrb[0].mxu0
    %959 = vmatprep.mubr.bf16.mxu0 0
    %960 = vmatmul.mubr.bf16.gmra.mrb[0].mxu0 %v807
    %v961 = vpop.f32.mrb[0].mxu0
    %v962 = vadd.f32 %v764, %v961
    %v963 = vpop.f32.mrb[0].mxu0
    %v964 = vpop.f32.mrb[0].mxu0
    %v965 = vadd.f32 %v764, %v964
    %v966 = vpop.f32.mrb[0].mxu0
    %967 = vmatprep.mubr.bf16.mxu0 0
    %968 = vmatmul.mubr.bf16.gmra.mrb[0].mxu0 %v810
    %v969 = vpop.f32.mrb[0].mxu0
    %v970 = vadd.f32 %v764, %v969
    %v971 = vpop.f32.mrb[0].mxu0
    %v972 = vpop.f32.mrb[0].mxu0
    %v973 = vadd.f32 %v764, %v972
    %v974 = vpop.f32.mrb[0].mxu0
    %975 = vmatprep.mubr.bf16.mxu0 0
    %976 = vmatmul.mubr.bf16.gmra.mrb[0].mxu0 %v813
    %v977 = vpop.f32.mrb[0].mxu0
    %v978 = vadd.f32 %v764, %v977
    %v979 = vpop.f32.mrb[0].mxu0
    %v980 = vpop.f32.mrb[0].mxu0
    %v981 = vadd.f32 %v764, %v980
    %v982 = vpop.f32.mrb[0].mxu0
    %983 = vmatprep.mubr.bf16.mxu0 0
    %984 = vmatmul.mubr.bf16.gmra.mrb[0].mxu0 %v816
    %v985 = vpop.f32.mrb[0].mxu0
    %v986 = vadd.f32 %v764, %v985
    %v987 = vpop.f32.mrb[0].mxu0
    %v988 = vpop.f32.mrb[0].mxu0
    %v989 = vadd.f32 %v764, %v988
    %v990 = vpop.f32.mrb[0].mxu0
    %991 = vmatprep.mubr.bf16.mxu0 0
    %992 = vmatmul.mubr.bf16.gmra.mrb[0].mxu0 %v819
    %v993 = vpop.f32.mrb[0].mxu0
    %v994 = vadd.f32 %v764, %v993
    %v995 = vpop.f32.mrb[0].mxu0
    %v996 = vpop.f32.mrb[0].mxu0
    %v997 = vadd.f32 %v764, %v996
    %v998 = vpop.f32.mrb[0].mxu0
    %999 = vmatprep.mubr.bf16.mxu0 0
    %1000 = vmatmul.mubr.bf16.gmra.mrb[0].mxu0 %v822
    %v1001 = vpop.f32.mrb[0].mxu0
    %v1002 = vadd.f32 %v764, %v1001
    %v1003 = vpop.f32.mrb[0].mxu0
    %v1004 = vpop.f32.mrb[0].mxu0
    %v1005 = vadd.f32 %v764, %v1004
    %v1006 = vpop.f32.mrb[0].mxu0
    %1007 = vmatprep.mubr.bf16.mxu0 0
    %1008 = vmatmul.mubr.bf16.gmra.mrb[0].mxu0 %v825
    %v1009 = vpop.f32.mrb[0].mxu0
    %v1010 = vadd.f32 %v764, %v1009
    %v1011 = vpop.f32.mrb[0].mxu0
    %v1012 = vpop.f32.mrb[0].mxu0
    %v1013 = vadd.f32 %v764, %v1012
    %v1014 = vpop.f32.mrb[0].mxu0
    %1015 = vmatprep.mubr.bf16.mxu0 0
    %1016 = vmatmul.mubr.bf16.gmra.mrb[0].mxu0 %v828
    %v1017 = vpop.f32.mrb[0].mxu0
    %v1018 = vadd.f32 %v764, %v1017
    %v1019 = vpop.f32.mrb[0].mxu0
    %v1020 = vpop.f32.mrb[0].mxu0
    %v1021 = vadd.f32 %v764, %v1020
    %v1022 = vpop.f32.mrb[0].mxu0
    %1023 = vmatprep.mubr.bf16.mxu0 0
    %1024 = vmatmul.mubr.bf16.gmra.mrb[0].mxu0 %v831
    %v1025 = vpop.f32.mrb[0].mxu0
    %v1026 = vadd.f32 %v764, %v1025
    %v1027 = vpop.f32.mrb[0].mxu0
    %v1028 = vpop.f32.mrb[0].mxu0
    %v1029 = vadd.f32 %v764, %v1028
    %v1030 = vpop.f32.mrb[0].mxu0
    %1031 = vmatprep.mubr.bf16.mxu0 0
    %1032 = vmatmul.mubr.bf16.gmra.mrb[0].mxu0 %v834
    %v1033 = vpop.f32.mrb[0].mxu0
    %v1034 = vadd.f32 %v764, %v1033
    %v1035 = vpop.f32.mrb[0].mxu0
    %v1036 = vpop.f32.mrb[0].mxu0
    %v1037 = vadd.f32 %v764, %v1036
    %v1038 = vpop.f32.mrb[0].mxu0
    %1039 = vmatprep.mubr.bf16.mxu0 0
    %1040 = vmatmul.mubr.bf16.gmra.mrb[0].mxu0 %v837
    %v1041 = vpop.f32.mrb[0].mxu0
    %v1042 = vadd.f32 %v764, %v1041
    %v1043 = vpop.f32.mrb[0].mxu0
    %v1044 = vpop.f32.mrb[0].mxu0
    %v1045 = vadd.f32 %v764, %v1044
    %v1046 = vpop.f32.mrb[0].mxu0
    %1047 = vmatprep.mubr.bf16.mxu0 0
    %1048 = vmatmul.mubr.bf16.gmra.mrb[0].mxu0 %v840
    %v1049 = vpop.f32.mrb[0].mxu0
    %v1050 = vadd.f32 %v764, %v1049
    %v1051 = vpop.f32.mrb[0].mxu0
    %v1052 = vpop.f32.mrb[0].mxu0
    %v1053 = vadd.f32 %v764, %v1052
    %v1054 = vpop.f32.mrb[0].mxu0
    %1055 = vmatprep.mubr.bf16.mxu0 0
    %1056 = vmatmul.mubr.bf16.gmra.mrb[0].mxu0 %v843
    %v1057 = vpop.f32.mrb[0].mxu0
    %v1058 = vadd.f32 %v764, %v1057
    %v1059 = vpop.f32.mrb[0].mxu0
    %v1060 = vpop.f32.mrb[0].mxu0
    %v1061 = vadd.f32 %v764, %v1060
    %v1062 = vpop.f32.mrb[0].mxu0
    %1063 = vmatprep.mubr.bf16.mxu0 0
    %1064 = vmatmul.mubr.bf16.gmra.mrb[0].mxu0 %v846
    %v1065 = vpop.f32.mrb[0].mxu0
    %v1066 = vadd.f32 %v764, %v1065
    %v1067 = vpop.f32.mrb[0].mxu0
    %v1068 = vpop.f32.mrb[0].mxu0
    %v1069 = vadd.f32 %v764, %v1068
    %v1070 = vpop.f32.mrb[0].mxu0
    %1071 = vmatprep.mubr.bf16.mxu0 0
    %1072 = vmatmul.mubr.bf16.gmra.mrb[0].mxu0 %v849
    %v1073 = vpop.f32.mrb[0].mxu0
    %v1074 = vadd.f32 %v764, %v1073
    %v1075 = vpop.f32.mrb[0].mxu0
    %v1076 = vpop.f32.mrb[0].mxu0
    %v1077 = vadd.f32 %v764, %v1076
    %v1078 = vpop.f32.mrb[0].mxu0
    %1079 = vmatprep.mubr.bf16.mxu0 0
    %1080 = vmatmul.mubr.bf16.gmra.mrb[0].mxu0 %v852
    %v1081 = vpop.f32.mrb[0].mxu0
    %v1082 = vadd.f32 %v764, %v1081
    %v1083 = vpop.f32.mrb[0].mxu0
    %v1084 = vpop.f32.mrb[0].mxu0
    %v1085 = vadd.f32 %v764, %v1084
    %v1086 = vpop.f32.mrb[0].mxu0
    %1087 = vmatprep.mubr.bf16.mxu0 0
    %1088 = vmatmul.mubr.bf16.gmra.mrb[0].mxu0 %v855
    %v1089 = vpop.f32.mrb[0].mxu0
    %v1090 = vadd.f32 %v764, %v1089
    %v1091 = vpop.f32.mrb[0].mxu0
    %v1092 = vpop.f32.mrb[0].mxu0
    %v1093 = vadd.f32 %v764, %v1092
    %v1094 = vpop.f32.mrb[0].mxu0
    %1095 = vmatprep.mubr.bf16.mxu0 0
    %1096 = vmatmul.mubr.bf16.gmra.mrb[0].mxu0 %v858
    %v1097 = vpop.f32.mrb[0].mxu0
    %v1098 = vadd.f32 %v764, %v1097
    %v1099 = vpop.f32.mrb[0].mxu0
    %v1100 = vpop.f32.mrb[0].mxu0
    %v1101 = vadd.f32 %v764, %v1100
    %v1102 = vpop.f32.mrb[0].mxu0
    %1103 = vmatprep.mubr.bf16.mxu0 0
    %1104 = vmatmul.mubr.bf16.gmra.mrb[0].mxu0 %v861
    %v1105 = vpop.f32.mrb[0].mxu0
    %v1106 = vadd.f32 %v764, %v1105
    %v1107 = vpop.f32.mrb[0].mxu0
    %v1108 = vpop.f32.mrb[0].mxu0
    %v1109 = vadd.f32 %v764, %v1108
    %v1110 = vpop.f32.mrb[0].mxu0
    %1111 = vmatprep.mubr.bf16.mxu0 0
    %1112 = vmatmul.mubr.bf16.gmra.mrb[0].mxu0 %v864
    %v1113 = vpop.f32.mrb[0].mxu0
    %v1114 = vadd.f32 %v764, %v1113
    %v1115 = vpop.f32.mrb[0].mxu0
    %v1116 = vpop.f32.mrb[0].mxu0
    %v1117 = vadd.f32 %v764, %v1116
    %v1118 = vpop.f32.mrb[0].mxu0
    %1119 = vmatprep.mubr.bf16.mxu0 0
    %1120 = vmatmul.mubr.bf16.gmra.mrb[0].mxu0 %v867
    %v1121 = vpop.f32.mrb[0].mxu0
    %v1122 = vadd.f32 %v764, %v1121
    %v1123 = vpop.f32.mrb[0].mxu0
    %v1124 = vpop.f32.mrb[0].mxu0
    %v1125 = vadd.f32 %v764, %v1124
    %v1126 = vpop.f32.mrb[0].mxu0
    %1127 = vmatprep.mubr.bf16.mxu0 0
    %1128 = vmatmul.mubr.bf16.gmra.mrb[0].mxu0 %v870
    %v1129 = vpop.f32.mrb[0].mxu0
    %v1130 = vadd.f32 %v764, %v1129
    %v1131 = vpop.f32.mrb[0].mxu0
    %v1132 = vpop.f32.mrb[0].mxu0
    %v1133 = vadd.f32 %v764, %v1132
    %v1134 = vpop.f32.mrb[0].mxu0
    %1135 = vmatprep.mubr.bf16.mxu0 0
    %1136 = vmatmul.mubr.bf16.gmra.mrb[0].mxu0 %v873
    %v1137 = vpop.f32.mrb[0].mxu0
    %v1138 = vadd.f32 %v764, %v1137
    %v1139 = vpop.f32.mrb[0].mxu0
    %v1140 = vpop.f32.mrb[0].mxu0
    %v1141 = vadd.f32 %v764, %v1140
    %v1142 = vpop.f32.mrb[0].mxu0
    %1143 = vmatprep.mubr.bf16.mxu0 0
    %1144 = vmatmul.mubr.bf16.gmra.mrb[0].mxu0 %v876
    %v1145 = vpop.f32.mrb[0].mxu0
    %v1146 = vadd.f32 %v764, %v1145
    %v1147 = vpop.f32.mrb[0].mxu0
    %v1148 = vpop.f32.mrb[0].mxu0
    %v1149 = vadd.f32 %v764, %v1148
    %v1150 = vpop.f32.mrb[0].mxu0
    %1151 = vmatprep.mubr.bf16.mxu0 0
    %1152 = vmatmul.mubr.bf16.gmra.mrb[0].mxu0 %v879
    %v1153 = vpop.f32.mrb[0].mxu0
    %v1154 = vadd.f32 %v764, %v1153
    %v1155 = vpop.f32.mrb[0].mxu0
    %v1156 = vpop.f32.mrb[0].mxu0
    %v1157 = vadd.f32 %v764, %v1156
    %v1158 = vpop.f32.mrb[0].mxu0
    %1159 = vmatprep.mubr.bf16.mxu0 0
    %1160 = vmatmul.mubr.bf16.gmra.mrb[0].mxu0 %v882
    %v1161 = vpop.f32.mrb[0].mxu0
    %v1162 = vadd.f32 %v764, %v1161
    %v1163 = vpop.f32.mrb[0].mxu0
    %v1164 = vpop.f32.mrb[0].mxu0
    %v1165 = vadd.f32 %v764, %v1164
    %v1166 = vpop.f32.mrb[0].mxu0
    %1167 = vmatprep.mubr.bf16.mxu0 0
    %1168 = vmatmul.mubr.bf16.gmra.mrb[0].mxu0 %v885
    %v1169 = vpop.f32.mrb[0].mxu0
    %v1170 = vadd.f32 %v764, %v1169
    %v1171 = vpop.f32.mrb[0].mxu0
    %v1172 = vpop.f32.mrb[0].mxu0
    %v1173 = vadd.f32 %v764, %v1172
    %v1174 = vpop.f32.mrb[0].mxu0
    %1175 = vdwg.mxu0
    %1176 = vst [vmem:[#allocation2] sm:$0xff] %v922
    %1177 = vst [vmem:[#allocation2 + $0x8] sm:$0xff] %v925
    %1178 = vst [vmem:[#allocation2 + $0x10] sm:$0xff] %v930
    %1179 = vst [vmem:[#allocation2 + $0x18] sm:$0xff] %v933
    %1180 = vst [vmem:[#allocation2 + $0x20] sm:$0xff] %v938
    %1181 = vst [vmem:[#allocation2 + $0x28] sm:$0xff] %v941
    %1182 = vst [vmem:[#allocation2 + $0x30] sm:$0xff] %v946
    %1183 = vst [vmem:[#allocation2 + $0x38] sm:$0xff] %v949
    %1184 = vst [vmem:[#allocation2 + $0x40] sm:$0xff] %v954
    %1185 = vst [vmem:[#allocation2 + $0x48] sm:$0xff] %v957
    %1186 = vst [vmem:[#allocation2 + $0x50] sm:$0xff] %v962
    %1187 = vst [vmem:[#allocation2 + $0x58] sm:$0xff] %v965
    %1188 = vst [vmem:[#allocation2 + $0x60] sm:$0xff] %v970
    %1189 = vst [vmem:[#allocation2 + $0x68] sm:$0xff] %v973
    %1190 = vst [vmem:[#allocation2 + $0x70] sm:$0xff] %v978
    %1191 = vst [vmem:[#allocation2 + $0x78] sm:$0xff] %v981
    %1192 = vst [vmem:[#allocation2 + $0x80] sm:$0xff] %v986
    %1193 = vst [vmem:[#allocation2 + $0x88] sm:$0xff] %v989
    %1194 = vst [vmem:[#allocation2 + $0x90] sm:$0xff] %v994
    %1195 = vst [vmem:[#allocation2 + $0x98] sm:$0xff] %v997
    %1196 = vst [vmem:[#allocation2 + $0xa0] sm:$0xff] %v1002
    %1197 = vst [vmem:[#allocation2 + $0xa8] sm:$0xff] %v1005
    %1198 = vst [vmem:[#allocation2 + $0xb0] sm:$0xff] %v1010
    %1199 = vst [vmem:[#allocation2 + $0xb8] sm:$0xff] %v1013
    %1200 = vst [vmem:[#allocation2 + $0xc0] sm:$0xff] %v1018
    %1201 = vst [vmem:[#allocation2 + $0xc8] sm:$0xff] %v1021
    %1202 = vst [vmem:[#allocation2 + $0xd0] sm:$0xff] %v1026
    %1203 = vst [vmem:[#allocation2 + $0xd8] sm:$0xff] %v1029
    %1204 = vst [vmem:[#allocation2 + $0xe0] sm:$0xff] %v1034
    %1205 = vst [vmem:[#allocation2 + $0xe8] sm:$0xff] %v1037
    %1206 = vst [vmem:[#allocation2 + $0xf0] sm:$0xff] %v1042
    %1207 = vst [vmem:[#allocation2 + $0xf8] sm:$0xff] %v1045
    %1208 = vst [vmem:[#allocation2 + $0x100] sm:$0xff] %v1050
    %1209 = vst [vmem:[#allocation2 + $0x108] sm:$0xff] %v1053
    %1210 = vst [vmem:[#allocation2 + $0x110] sm:$0xff] %v1058
    %1211 = vst [vmem:[#allocation2 + $0x118] sm:$0xff] %v1061
    %1212 = vst [vmem:[#allocation2 + $0x120] sm:$0xff] %v1066
    %1213 = vst [vmem:[#allocation2 + $0x128] sm:$0xff] %v1069
    %1214 = vst [vmem:[#allocation2 + $0x130] sm:$0xff] %v1074
    %1215 = vst [vmem:[#allocation2 + $0x138] sm:$0xff] %v1077
    %1216 = vst [vmem:[#allocation2 + $0x140] sm:$0xff] %v1082
    %1217 = vst [vmem:[#allocation2 + $0x148] sm:$0xff] %v1085
    %1218 = vst [vmem:[#allocation2 + $0x150] sm:$0xff] %v1090
    %1219 = vst [vmem:[#allocation2 + $0x158] sm:$0xff] %v1093
    %1220 = vst [vmem:[#allocation2 + $0x160] sm:$0xff] %v1098
    %1221 = vst [vmem:[#allocation2 + $0x168] sm:$0xff] %v1101
    %1222 = vst [vmem:[#allocation2 + $0x170] sm:$0xff] %v1106
    %1223 = vst [vmem:[#allocation2 + $0x178] sm:$0xff] %v1109
    %1224 = vst [vmem:[#allocation2 + $0x180] sm:$0xff] %v1114
    %1225 = vst [vmem:[#allocation2 + $0x188] sm:$0xff] %v1117
    %1226 = vst [vmem:[#allocation2 + $0x190] sm:$0xff] %v1122
    %1227 = vst [vmem:[#allocation2 + $0x198] sm:$0xff] %v1125
    %1228 = vst [vmem:[#allocation2 + $0x1a0] sm:$0xff] %v1130
    %1229 = vst [vmem:[#allocation2 + $0x1a8] sm:$0xff] %v1133
    %1230 = vst [vmem:[#allocation2 + $0x1b0] sm:$0xff] %v1138
    %1231 = vst [vmem:[#allocation2 + $0x1b8] sm:$0xff] %v1141
    %1232 = vst [vmem:[#allocation2 + $0x1c0] sm:$0xff] %v1146
    %1233 = vst [vmem:[#allocation2 + $0x1c8] sm:$0xff] %v1149
    %1234 = vst [vmem:[#allocation2 + $0x1d0] sm:$0xff] %v1154
    %1235 = vst [vmem:[#allocation2 + $0x1d8] sm:$0xff] %v1157
    %1236 = vst [vmem:[#allocation2 + $0x1e0] sm:$0xff] %v1162
    %1237 = vst [vmem:[#allocation2 + $0x1e8] sm:$0xff] %v1165
    %1238 = vst [vmem:[#allocation2 + $0x1f0] sm:$0xff] %v1170
    %1239 = vst [vmem:[#allocation2 + $0x1f8] sm:$0xff] %v1173
    // Predicated region
    $region22: #{tpu_custom_call.1} parent=1 // pred_check
      _
    $region23: #{tpu_custom_call.1} parent=1 // pred_check_branch
      %1241 = sbr.rel (0) target = $region25
    $region24: #{tpu_custom_call.1} parent=1 // pred_region
      %s1243 = ssub.s32 8192, 8192
      %1244 = vsyncadd [#allocation3], %s1243
      %s1245 = sshll.u32 [#allocation2], 4
      %s1246 = int_to_ptr.vmem [resolvable:$true] %s1245
      %1251 = dma.vmem_to_hbm [thread:$0]  %s1246, 8192, %s5, [#allocation3], 128, 128, 8
    $region25: #{tpu_custom_call.1} parent=1 // pred_fallthru
      _
    // Predicated region
    $region26: #{tpu_custom_call.1} parent=1 // pred_check
      _
    $region27: #{tpu_custom_call.1} parent=1 // pred_check_branch
      %1253 = sbr.rel (0) target = $region29
    $region28: #{tpu_custom_call.1} parent=1 // pred_region
      %1254 = dma.done [#allocation3], 8192
    $region29: #{tpu_custom_call.1} parent=1 // pred_fallthru
      _
    %1255 = vsyncpa [#allocation3], 1

</llo_original>
